<compile_context>
chip_gen: v7x
topology: tpu7x:2x2x1
jax: 0.10.0
libtpu: 0.0.40
codegen_flags: <defaults>
</compile_context>

<pallas_src>
import jax
import jax.numpy as jnp
from jax.experimental import pallas as pl
from jax.experimental.pallas import tpu as pltpu

IN_FEATURES = 64
OUT_FEATURES = 128


def linear_hardsigmoid_kernel(x_ref, w_ref, b_ref, o_ref):
    # clip(x @ (W^T/6) + (b+3)/6, 0, 1); constants were folded on the host.
    y = jnp.dot(x_ref[...], w_ref[...], preferred_element_type=jnp.float32)
    y = y + b_ref[...].astype(jnp.float32)          # bias + clip math in f32
    o_ref[...] = jnp.clip(y, 0.0, 1.0).astype(o_ref.dtype)


def _round_up(n, m):
    return ((n + m - 1) // m) * m


def model_forward(x, w_fold_t, b_fold, *, batch_tile=2048,
                  out_dtype=jnp.float32,
                  small_block_vmem_bytes=2 << 20):
    """x: [B, 64]; w_fold_t: [64, 128] (= W^T / 6); b_fold: [128] (= (b+3)/6).

    out_dtype: set to jnp.bfloat16 to halve output HBM traffic when downstream
    consumers tolerate it (hardsigmoid output lives in [0, 1]).
    """
    B = x.shape[0]
    b2d = b_fold.reshape(1, OUT_FEATURES).astype(jnp.float32)
    out_itemsize = jnp.dtype(out_dtype).itemsize
    bytes_per_row = IN_FEATURES * x.dtype.itemsize + OUT_FEATURES * out_itemsize

    # --- Tiny-batch fast path: whole arrays resident, no grid / no pipeline
    # bookkeeping. Gated on actual VMEM bytes of (x block + out block).
    if B * bytes_per_row <= small_block_vmem_bytes:
        return pl.pallas_call(
            linear_hardsigmoid_kernel,
            out_shape=jax.ShapeDtypeStruct((B, OUT_FEATURES), out_dtype),
        )(x, w_fold_t, b2d)

    # --- Streaming path: tile only the batch dim; weights/bias stay resident.
    # Keep >= 2 grid steps so a v7x chip can shard rows across its 2 TCs.
    tile = min(_round_up(batch_tile, 8), _round_up(pl.cdiv(B, 2), 8))
    grid = (pl.cdiv(B, tile),)

    # Double-buffered x + out tiles, plus resident weights/bias.
    vmem_need = (2 * tile * bytes_per_row
                 + IN_FEATURES * OUT_FEATURES * w_fold_t.dtype.itemsize
                 + OUT_FEATURES * 4)
    if vmem_need > (16 << 20):            # v5e default scoped-VMEM budget
        compiler_params = pltpu.CompilerParams(
            dimension_semantics=("parallel",),
            vmem_limit_bytes=int(vmem_need * 1.5),
        )
    else:
        compiler_params = pltpu.CompilerParams(
            dimension_semantics=("parallel",),
        )

    return pl.pallas_call(
        linear_hardsigmoid_kernel,
        out_shape=jax.ShapeDtypeStruct((B, OUT_FEATURES), out_dtype),
        grid=grid,
        in_specs=[
            pl.BlockSpec((tile, IN_FEATURES), lambda i: (i, 0)),
            pl.BlockSpec((IN_FEATURES, OUT_FEATURES), lambda i: (0, 0)),
            pl.BlockSpec((1, OUT_FEATURES), lambda i: (0, 0)),
        ],
        out_specs=pl.BlockSpec((tile, OUT_FEATURES), lambda i: (i, 0)),
        compiler_params=compiler_params,
    )(x, w_fold_t, b2d)


if __name__ == "__main__":
    key = jax.random.PRNGKey(0)
    kx, kw, kb = jax.random.split(key, 3)

    # Shapes consistent with the PyTorch module: x of shape [1, 64].
    B = 1
    x = jax.random.normal(kx, (B, IN_FEATURES), dtype=jnp.float32)

    # Deterministic parameter init (mimics nn.Linear uniform init bounds).
    bound = 1.0 / (IN_FEATURES ** 0.5)
    w = jax.random.uniform(kw, (OUT_FEATURES, IN_FEATURES),
                           minval=-bound, maxval=bound, dtype=jnp.float32)
    b = jax.random.uniform(kb, (OUT_FEATURES,),
                           minval=-bound, maxval=bound, dtype=jnp.float32)
    w_t = jnp.transpose(w)                     # [64, 128] so y = x @ W^T

    # One-time fold of the hardsigmoid constants into the parameters.
    w_fold = w_t / 6.0
    b_fold = (b + 3.0) / 6.0

    def reference(xv):
        return jnp.clip(xv @ w_t + b + 3.0, 0.0, 6.0) / 6.0

    # Path 1: module's actual shape (B=1) -> tiny-batch no-grid path, f32.
    out = jax.block_until_ready(model_forward(x, w_fold, b_fold))
    ref = reference(x)
    assert out.shape == (B, OUT_FEATURES)
    assert jnp.allclose(out, ref, atol=1e-5, rtol=1e-5)

    # Path 2: large batch -> gridded streaming path (>= 2 steps, partial last
    # tile: 4416 = 2*2048 + 320), f32 in/out.
    B2 = 4416
    x2 = jax.random.normal(jax.random.PRNGKey(1), (B2, IN_FEATURES),
                           dtype=jnp.float32)
    out2 = jax.block_until_ready(model_forward(x2, w_fold, b_fold))
    ref2 = reference(x2)
    assert out2.shape == (B2, OUT_FEATURES)
    assert jnp.allclose(out2, ref2, atol=1e-5, rtol=1e-5)

    # Path 3: same large batch with bf16 output (halves writeback traffic).
    out3 = jax.block_until_ready(
        model_forward(x2, w_fold, b_fold, out_dtype=jnp.bfloat16))
    assert out3.dtype == jnp.bfloat16
    assert jnp.allclose(out3.astype(jnp.float32), ref2, atol=1e-2, rtol=1e-2)

    print("KERNEL_OK")
</pallas_src>

<mosaic_0001>
module attributes {stable_mosaic.version = 11 : i64} {
  func.func @linear_hardsigmoid_kernel(%arg0: memref<1x64xf32, #tpu.memory_space<vmem>>, %arg1: memref<64x128xf32, #tpu.memory_space<vmem>>, %arg2: memref<1x128xf32, #tpu.memory_space<vmem>>, %arg3: memref<1x128xf32, #tpu.memory_space<vmem>>) attributes {dimension_semantics = [], scalar_prefetch = 0 : i64, scratch_operands = 0 : i64, tpu.core_type = #tpu.core_type<tc>} {
    %c0 = arith.constant 0 : index
    %c0_0 = arith.constant 0 : index
    %0 = vector.load %arg0[%c0, %c0_0] : memref<1x64xf32, #tpu.memory_space<vmem>>, vector<1x64xf32>
    %c0_1 = arith.constant 0 : index
    %c0_2 = arith.constant 0 : index
    %1 = vector.load %arg1[%c0_1, %c0_2] : memref<64x128xf32, #tpu.memory_space<vmem>>, vector<64x128xf32>
    %cst = arith.constant dense<0.000000e+00> : vector<1x128xf32>
    %2 = tpu.matmul %0, %1, %cst {dimension_numbers = #tpu.dot_dimension_numbers<[1], [0], [0], [1], [0, 0, 1, 1], [], []>} : vector<1x64xf32>, vector<64x128xf32>, vector<1x128xf32> -> vector<1x128xf32>
    %c0_3 = arith.constant 0 : index
    %c0_4 = arith.constant 0 : index
    %3 = vector.load %arg2[%c0_3, %c0_4] : memref<1x128xf32, #tpu.memory_space<vmem>>, vector<1x128xf32>
    %4 = arith.addf %2, %3 : vector<1x128xf32>
    %cst_5 = arith.constant 0.000000e+00 : f32
    %cst_6 = arith.constant 1.000000e+00 : f32
    %5 = vector.broadcast %cst_5 : f32 to vector<1x128xf32>
    %6 = arith.maximumf %5, %4 : vector<1x128xf32>
    %7 = vector.broadcast %cst_6 : f32 to vector<1x128xf32>
    %8 = arith.minimumf %7, %6 : vector<1x128xf32>
    %c0_7 = arith.constant 0 : index
    %c0_8 = arith.constant 0 : index
    %9 = vector.load %arg3[%c0_7, %c0_8] : memref<1x128xf32, #tpu.memory_space<vmem>>, vector<1x128xf32>
    tpu.vector_store %arg3[%c0_7, %c0_8], %8 {strides = array<i32>} : memref<1x128xf32, #tpu.memory_space<vmem>>, vector<1x128xf32>,
    return
  }
}

</mosaic_0001>

<llo_original>
// kernel: tpu_custom_call.1
$region0: #{tpu_custom_call.1}
  #allocation0 [shape = 'u32[]', space=smem, size = 0x4, offset = 0x4, fixed_abs, tag = 'smem constant byte address 0x4 - core index']
  #allocation1 [shape = 'u32[144,128]{1,0:T(1,128)}', space=vmem, size = 0x12000, scoped, tag = 'internal scratch']
  %s0 = inlined_call_operand.hbm [shape: f32[1,64], index: 0, kind: input, shape index: {}]
  %s1 = inlined_call_operand.hbm [shape: f32[64,128], index: 1, kind: input, shape index: {}]
  %s2 = inlined_call_operand.vmem [shape: f32[1,128], index: 2, kind: input, shape index: {}]
  %s3 = inlined_call_operand.hbm [shape: f32[1,128], index: 3, kind: output, shape index: {}]
  %s4 = sld [smem:[#allocation0]]
  $region30: #{tpu_custom_call.1} parent=0
    _
  %s6 = ssub.s32 1, %s4
  %s7 = scalar_select 0, %s6, %s4
  $region1: #{tpu_custom_call.1} parent=0
    #allocation2 [shape = 'u8[512]{0}', space=vmem, size = 0x400, scoped, tag = 'input window, operand 0, single buffered']
    #allocation3 [shape = 's32[1]{0}', space=sflag, size = 0x4, scoped, tag = 'scoped memory for tpu_custom_call.1']
    #allocation4 [shape = 's32[1]{0}', space=sflag, size = 0x4, scoped, tag = 'scoped memory for tpu_custom_call.1']
    #allocation5 [shape = 'u8[32768]{0}', space=vmem, size = 0x8000, scoped, tag = 'input window, operand 1, single buffered']
    #allocation6 [shape = 's32[1]{0}', space=sflag, size = 0x4, scoped, tag = 'scoped memory for tpu_custom_call.1']
    #allocation7 [shape = 'u8[512]{0}', space=vmem, size = 0x400, scoped, tag = 'output window, operand 0, single buffered']
    %8 = vsyncpa [#allocation3], 0
    %9 = vsyncpa [#allocation6], 0
    %10 = vsyncpa [#allocation4], 0
    // Predicated region
    $region2: #{tpu_custom_call.1} parent=1 // pred_check
      _
    $region3: #{tpu_custom_call.1} parent=1 // pred_check_branch
      %12 = sbr.rel (0) target = $region5
    $region4: #{tpu_custom_call.1} parent=1 // pred_region
      %s14 = ssub.s32 16, 16
      %15 = vsyncadd [#allocation3], %s14
      %s17 = sshll.u32 [#allocation2], 4
      %s18 = int_to_ptr.vmem [resolvable:$true] %s17
      %20 = dma.hbm_to_vmem [thread:$0]  %s0, 16, %s18, [#allocation3]
    $region5: #{tpu_custom_call.1} parent=1 // pred_fallthru
      _
    // Predicated region
    $region6: #{tpu_custom_call.1} parent=1 // pred_check
      _
    $region7: #{tpu_custom_call.1} parent=1 // pred_check_branch
      %22 = sbr.rel (0) target = $region9
    $region8: #{tpu_custom_call.1} parent=1 // pred_region
      %s24 = ssub.s32 1024, 1024
      %25 = vsyncadd [#allocation6], %s24
      %s26 = sshll.u32 [#allocation5], 4
      %s27 = int_to_ptr.vmem [resolvable:$true] %s26
      %32 = dma.hbm_to_vmem [thread:$0]  %s1, 1024, %s27, [#allocation6], 128, 128, 8
    $region9: #{tpu_custom_call.1} parent=1 // pred_fallthru
      _
    // Predicated region
    $region10: #{tpu_custom_call.1} parent=1 // pred_check
      _
    $region11: #{tpu_custom_call.1} parent=1 // pred_check_branch
      %34 = sbr.rel (0) target = $region13
    $region12: #{tpu_custom_call.1} parent=1 // pred_region
      _
    $region13: #{tpu_custom_call.1} parent=1 // pred_fallthru
      _
    // Predicated region
    $region14: #{tpu_custom_call.1} parent=1 // pred_check
      _
    $region15: #{tpu_custom_call.1} parent=1 // pred_check_branch
      %36 = sbr.rel (0) target = $region17
    $region16: #{tpu_custom_call.1} parent=1 // pred_region
      %37 = dma.done [#allocation3], 16
    $region17: #{tpu_custom_call.1} parent=1 // pred_fallthru
      _
    // Predicated region
    $region18: #{tpu_custom_call.1} parent=1 // pred_check
      _
    $region19: #{tpu_custom_call.1} parent=1 // pred_check_branch
      %39 = sbr.rel (0) target = $region21
    $region20: #{tpu_custom_call.1} parent=1 // pred_region
      %40 = dma.done [#allocation6], 1024
    $region21: #{tpu_custom_call.1} parent=1 // pred_fallthru
      _
    %v41 = vld [vmem:[#allocation2] sm:$0x1]
    %v42 = vld [vmem:[#allocation5] sm:$0xff]
    %v43 = vld [vmem:[#allocation5 + $0x8] sm:$0xff]
    %v44 = vld [vmem:[#allocation5 + $0x10] sm:$0xff]
    %v45 = vld [vmem:[#allocation5 + $0x18] sm:$0xff]
    %v46 = vld [vmem:[#allocation5 + $0x20] sm:$0xff]
    %v47 = vld [vmem:[#allocation5 + $0x28] sm:$0xff]
    %v48 = vld [vmem:[#allocation5 + $0x30] sm:$0xff]
    %v49 = vld [vmem:[#allocation5 + $0x38] sm:$0xff]
    %v50 = vld [vmem:[%s2] sm:$0x1]
    %vm51 = vcmask 523264
    %v53 = vsel %vm51, %v41, 0
    %55 = vmatprep.subr.mxu0 0.0
    %56 = vmatpush1.msra.mxu0 %v42
    %57 = vmatprep.subr.mxu0 0.0
    %58 = vmatpush1.msra.mxu0 %v43
    %59 = vmatprep.subr.mxu0 0.0
    %60 = vmatpush1.msra.mxu0 %v44
    %61 = vmatprep.subr.mxu0 0.0
    %62 = vmatpush1.msra.mxu0 %v45
    %63 = vmatprep.subr.mxu0 0.0
    %64 = vmatpush1.msra.mxu0 %v46
    %65 = vmatprep.subr.mxu0 0.0
    %66 = vmatpush1.msra.mxu0 %v47
    %67 = vmatprep.subr.mxu0 0.0
    %68 = vmatpush1.msra.mxu0 %v48
    %69 = vmatprep.subr.mxu0 0.0
    %70 = vmatpush1.msra.mxu0 %v49
    %71 = vmatprep.subr.mxu0 0.0
    %72 = vmatpush1.msra.mxu0 0.0
    %73 = vmatprep.subr.mxu0 0.0
    %74 = vmatpush1.msra.mxu0 0.0
    %75 = vmatprep.subr.mxu0 0.0
    %76 = vmatpush1.msra.mxu0 0.0
    %77 = vmatprep.subr.mxu0 0.0
    %78 = vmatpush1.msra.mxu0 0.0
    %79 = vmatprep.subr.mxu0 0.0
    %80 = vmatpush1.msra.mxu0 0.0
    %81 = vmatprep.subr.mxu0 0.0
    %82 = vmatpush1.msra.mxu0 0.0
    %83 = vmatprep.subr.mxu0 0.0
    %84 = vmatpush1.msra.mxu0 0.0
    %85 = vmatprep.subr.mxu0 0.0
    %86 = vmatpush1.msra.mxu0 0.0
    %87 = vmatprep.subr.mxu0 0.0
    %88 = vmatpush1.msra.mxu0 0.0
    %89 = vmatprep.subr.mxu0 0.0
    %90 = vmatpush1.msra.mxu0 0.0
    %91 = vmatprep.subr.mxu0 0.0
    %92 = vmatpush1.msra.mxu0 0.0
    %93 = vmatprep.subr.mxu0 0.0
    %94 = vmatpush1.msra.mxu0 0.0
    %95 = vmatprep.subr.mxu0 0.0
    %96 = vmatpush1.msra.mxu0 0.0
    %97 = vmatprep.subr.mxu0 0.0
    %98 = vmatpush1.msra.mxu0 0.0
    %99 = vmatprep.subr.mxu0 0.0
    %100 = vmatpush1.msra.mxu0 0.0
    %101 = vmatprep.subr.mxu0 0.0
    %102 = vmatpush1.msra.mxu0 0.0
    %103 = vmatprep.subr.mxu0 0.0
    %104 = vmatpush1.msra.mxu0 0.0
    %105 = vmatprep.subr.mxu0 0.0
    %106 = vmatpush1.msra.mxu0 0.0
    %107 = vmatprep.subr.mxu0 0.0
    %108 = vmatpush1.msra.mxu0 0.0
    %109 = vmatprep.subr.mxu0 0.0
    %110 = vmatpush1.msra.mxu0 0.0
    %111 = vmatprep.subr.mxu0 0.0
    %112 = vmatpush1.msra.mxu0 0.0
    %113 = vmatprep.subr.mxu0 0.0
    %114 = vmatpush1.msra.mxu0 0.0
    %115 = vmatprep.subr.mxu0 0.0
    %116 = vmatpush1.msra.mxu0 0.0
    %117 = vmatprep.subr.mxu0 0.0
    %118 = vmatpush1.msra.mxu0 0.0
    %119 = vmatprep.mubr.f32.mxu0 0.0
    %120 = vmatmul.mubr.f32.gmra.mrb[0].mxu0 %v53
    %v121 = vpop.f32.mrb[0].mxu0
    %v122 = vadd.f32 %v50, %v121
    %v123 = vpop.f32.mrb[0].mxu0
    %124 = vdwg.mxu0
    %v125 = vmax.f32 %v122, 0.0
    %v126 = vmin.f32 %v125, 1.0
    %127 = vst [vmem:[#allocation7] sm:$0x1] %v126
    // Predicated region
    $region22: #{tpu_custom_call.1} parent=1 // pred_check
      _
    $region23: #{tpu_custom_call.1} parent=1 // pred_check_branch
      %129 = sbr.rel (0) target = $region25
    $region24: #{tpu_custom_call.1} parent=1 // pred_region
      %s131 = ssub.s32 16, 16
      %132 = vsyncadd [#allocation4], %s131
      %s134 = sshll.u32 [#allocation7], 4
      %s135 = int_to_ptr.vmem [resolvable:$true] %s134
      %137 = dma.vmem_to_hbm [thread:$0]  %s135, 16, %s3, [#allocation4]
    $region25: #{tpu_custom_call.1} parent=1 // pred_fallthru
      _
    // Predicated region
    $region26: #{tpu_custom_call.1} parent=1 // pred_check
      _
    $region27: #{tpu_custom_call.1} parent=1 // pred_check_branch
      %139 = sbr.rel (0) target = $region29
    $region28: #{tpu_custom_call.1} parent=1 // pred_region
      %140 = dma.done [#allocation4], 16
    $region29: #{tpu_custom_call.1} parent=1 // pred_fallthru
      _
    %141 = vsyncpa [#allocation3], 1
    %142 = vsyncpa [#allocation6], 1
    %143 = vsyncpa [#allocation4], 1

</llo_original>
